<compile_context>
chip_gen: v5e
topology: v5e:2x2
jax: 0.10.0
libtpu: 0.0.40
codegen_flags: <defaults>
</compile_context>

<pallas_src>
import jax
import jax.numpy as jnp
from jax.experimental import pallas as pl
from jax.experimental.pallas import tpu as pltpu

_LANE = 128
_BLOCK_BUDGET_BYTES = 2 * 1024 * 1024  # per-block input bytes target


def sam_kernel(w_ref, x_ref, o_ref):
    # w_ref: SMEM (3,)  -> [w_mp, w_ap / C, bias]   (1x1 conv, 2 in / 1 out ch, 1/C folded)
    # x_ref: VMEM (B_TILE, C, T_HW) block
    # o_ref: VMEM (B_TILE, C, T_HW)
    xf = x_ref[...].astype(jnp.float32)                 # (B_TILE, C, T_HW)
    mp = jnp.max(xf, axis=1, keepdims=True)             # (B_TILE, 1, T_HW) == topk(x,1,dim=1)
    sp = jnp.sum(xf, axis=1, keepdims=True)             # (B_TILE, 1, T_HW); 1/C is in w_ref[1]
    score = w_ref[0] * mp + w_ref[1] * sp + w_ref[2]
    attn = jax.nn.sigmoid(score)                        # (B_TILE, 1, T_HW)
    # Re-read x from VMEM for the final multiply: with large tiles this lets the
    # compiler stream loads instead of keeping the whole f32 block live in vregs.
    o_ref[...] = (attn * x_ref[...].astype(jnp.float32)).astype(o_ref.dtype)


def _pick_tiles(N, C, HW_pad, itemsize):
    """Choose (B_TILE, T_HW): lane-dense, VMEM-bounded, overhead-amortized."""
    # Largest 128-multiple lane count keeping one input block under budget.
    max_lanes = max(_LANE, ((_BLOCK_BUDGET_BYTES // max(1, C * itemsize)) // _LANE) * _LANE)
    t_hw = min(HW_pad, max_lanes)
    while HW_pad % t_hw:          # walk down to a divisor (terminates at 128)
        t_hw -= _LANE
    # Fold batch elements only when the whole padded spatial extent is one tile.
    b_tile = 1
    if t_hw == HW_pad:
        while (b_tile * 2 <= N and N % (b_tile * 2) == 0
               and 2 * b_tile * C * HW_pad * itemsize <= _BLOCK_BUDGET_BYTES):
            b_tile *= 2
    return b_tile, t_hw


def sam_forward(x, conv_weight, conv_bias):
    """x: (N, C, H, W). conv_weight: (1, 2, 1, 1). conv_bias: (1,)."""
    N, C, H, W = x.shape
    HW = H * W
    HW_pad = ((HW + _LANE - 1) // _LANE) * _LANE

    x_flat = x.reshape(N, C, HW)
    if HW_pad != HW:
        # Pad spatial axis to a multiple of 128 for lane-dense (unmasked) stores.
        x_flat = jnp.pad(x_flat, ((0, 0), (0, 0), (0, HW_pad - HW)))

    itemsize = jnp.dtype(x.dtype).itemsize
    b_tile, t_hw = _pick_tiles(N, C, HW_pad, itemsize)

    # Flatten the 1x1 conv into 3 scalars; fold 1/C into the avg-pool weight so
    # the kernel does a sum (no extra per-block multiply for the mean).
    w2 = conv_weight.reshape(2).astype(jnp.float32)
    w = jnp.stack([w2[0], w2[1] / jnp.float32(C),
                   conv_bias.reshape(1)[0].astype(jnp.float32)])

    grid = (N // b_tile, HW_pad // t_hw)
    cost = pl.CostEstimate(
        flops=5 * N * C * HW_pad,
        transcendentals=N * HW_pad,
        bytes_accessed=2 * N * C * HW_pad * itemsize,
    )

    out_flat = pl.pallas_call(
        sam_kernel,
        out_shape=jax.ShapeDtypeStruct((N, C, HW_pad), x.dtype),
        grid=grid,
        in_specs=[
            pl.BlockSpec(memory_space=pltpu.MemorySpace.SMEM),            # conv params
            pl.BlockSpec((b_tile, C, t_hw), lambda n, s: (n, 0, s)),      # x tile
        ],
        out_specs=pl.BlockSpec((b_tile, C, t_hw), lambda n, s: (n, 0, s)),
        compiler_params=pltpu.CompilerParams(
            dimension_semantics=("parallel", "parallel")),
        cost_estimate=cost,
    )(w, x_flat)

    if HW_pad != HW:
        out_flat = out_flat[:, :, :HW]
    return out_flat.reshape(N, C, H, W)


def sam_reference(x, conv_weight, conv_bias):
    """Pure-JAX reference mirroring the PyTorch module."""
    mp = jnp.max(x, axis=1, keepdims=True)
    ap = jnp.mean(x, axis=1, keepdims=True)
    w = conv_weight.reshape(2)
    score = w[0] * mp + w[1] * ap + conv_bias.reshape(1)[0]
    return jax.nn.sigmoid(score) * x


if __name__ == "__main__":
    key = jax.random.PRNGKey(0)
    kx, kw, kb = jax.random.split(key, 3)

    N, C, H, W = 2, 4, 16, 16
    x = jax.random.normal(kx, (N, C, H, W), dtype=jnp.float32)

    # Deterministic init of nn.Conv2d(2, 1, 1) parameters (synthetic, not a checkpoint).
    conv_weight = jax.random.normal(kw, (1, 2, 1, 1), dtype=jnp.float32) * 0.5
    conv_bias = jax.random.normal(kb, (1,), dtype=jnp.float32) * 0.1

    out = sam_forward(x, conv_weight, conv_bias)
    out = jax.block_until_ready(out)

    ref = sam_reference(x, conv_weight, conv_bias)
    assert out.shape == (N, C, H, W)
    assert jnp.allclose(out, ref, atol=1e-5, rtol=1e-5), "mismatch vs reference"

    print("KERNEL_OK")
</pallas_src>

<mosaic_0001>
module attributes {stable_mosaic.version = 11 : i64} {
  func.func @sam_kernel(%arg0: i32, %arg1: i32, %arg2: memref<3xf32, #tpu.memory_space<smem>>, %arg3: memref<2x4x256xf32, #tpu.memory_space<vmem>>, %arg4: memref<2x4x256xf32, #tpu.memory_space<vmem>>) attributes {dimension_semantics = [#tpu.dimension_semantics<parallel>, #tpu.dimension_semantics<parallel>], iteration_bounds = array<i64: 1, 1>, scalar_prefetch = 0 : i64, scratch_operands = 0 : i64, tpu.core_type = #tpu.core_type<tc>, window_params = [{transform_indices = @transform_0, window_bounds = array<i64: 3>}, {transform_indices = @transform_1, window_bounds = array<i64: 2, 4, 256>}, {transform_indices = @transform_2, window_bounds = array<i64: 2, 4, 256>}]} {
    %c0 = arith.constant 0 : index
    %c0_0 = arith.constant 0 : index
    %c0_1 = arith.constant 0 : index
    %0 = vector.load %arg3[%c0, %c0_0, %c0_1] : memref<2x4x256xf32, #tpu.memory_space<vmem>>, vector<2x4x256xf32>
    %cst = arith.constant dense<0xFF800000> : vector<2x256xf32>
    %1 = vector.multi_reduction <maximumf>, %0, %cst [1] : vector<2x4x256xf32> to vector<2x256xf32>
    %2 = vector.shape_cast %1 : vector<2x256xf32> to vector<2x1x256xf32>
    %cst_2 = arith.constant dense<0.000000e+00> : vector<2x256xf32>
    %3 = vector.multi_reduction <add>, %0, %cst_2 [1] : vector<2x4x256xf32> to vector<2x256xf32>
    %4 = vector.shape_cast %3 : vector<2x256xf32> to vector<2x1x256xf32>
    %c0_3 = arith.constant 0 : index
    %5 = memref.load %arg2[%c0_3] : memref<3xf32, #tpu.memory_space<smem>>
    %6 = vector.broadcast %5 : f32 to vector<2x1x256xf32>
    %7 = arith.mulf %6, %2 : vector<2x1x256xf32>
    %c1 = arith.constant 1 : index
    %8 = memref.load %arg2[%c1] : memref<3xf32, #tpu.memory_space<smem>>
    %9 = vector.broadcast %8 : f32 to vector<2x1x256xf32>
    %10 = arith.mulf %9, %4 : vector<2x1x256xf32>
    %11 = arith.addf %7, %10 : vector<2x1x256xf32>
    %c2 = arith.constant 2 : index
    %12 = memref.load %arg2[%c2] : memref<3xf32, #tpu.memory_space<smem>>
    %13 = vector.broadcast %12 : f32 to vector<2x1x256xf32>
    %14 = arith.addf %11, %13 : vector<2x1x256xf32>
    %15 = arith.negf %14 : vector<2x1x256xf32>
    %16 = math.exp %15 : vector<2x1x256xf32>
    %cst_4 = arith.constant 1.000000e+00 : f32
    %17 = vector.broadcast %cst_4 : f32 to vector<2x1x256xf32>
    %18 = arith.addf %17, %16 : vector<2x1x256xf32>
    %19 = arith.divf %17, %18 : vector<2x1x256xf32>
    %c0_5 = arith.constant 0 : index
    %c0_6 = arith.constant 0 : index
    %c0_7 = arith.constant 0 : index
    %20 = vector.load %arg3[%c0_5, %c0_6, %c0_7] : memref<2x4x256xf32, #tpu.memory_space<vmem>>, vector<2x4x256xf32>
    %21 = vector.broadcast %19 : vector<2x1x256xf32> to vector<2x4x256xf32>
    %22 = arith.mulf %21, %20 : vector<2x4x256xf32>
    %c0_8 = arith.constant 0 : index
    %c0_9 = arith.constant 0 : index
    %c0_10 = arith.constant 0 : index
    %23 = vector.load %arg4[%c0_8, %c0_9, %c0_10] : memref<2x4x256xf32, #tpu.memory_space<vmem>>, vector<2x4x256xf32>
    tpu.vector_store %arg4[%c0_8, %c0_9, %c0_10], %22 {strides = array<i32>} : memref<2x4x256xf32, #tpu.memory_space<vmem>>, vector<2x4x256xf32>,
    return
  }
  func.func @transform_0(%arg0: i32, %arg1: i32) -> i32 {
    %c0_i32 = arith.constant 0 : i32
    %c0_i32_0 = arith.constant 0 : i32
    return %c0_i32 : i32
  }
  func.func @transform_1(%arg0: i32, %arg1: i32) -> (i32, i32, i32) {
    %c0_i32 = arith.constant 0 : i32
    %c0_i32_0 = arith.constant 0 : i32
    return %arg0, %c0_i32, %arg1 : i32, i32, i32
  }
  func.func @transform_2(%arg0: i32, %arg1: i32) -> (i32, i32, i32) {
    %c0_i32 = arith.constant 0 : i32
    %c0_i32_0 = arith.constant 0 : i32
    return %arg0, %c0_i32, %arg1 : i32, i32, i32
  }
}

</mosaic_0001>

<llo_original>
// kernel: tpu_custom_call.1
$region0: #{tpu_custom_call.1}
  #allocation0 [shape = 'u32[]', space=smem, size = 0x4, offset = 0x4, fixed_abs, tag = 'smem constant byte address 0x4 - core index']
  #allocation1 [shape = 'u32[72,128]{1,0:T(1,128)}', space=vmem, size = 0x9000, scoped, tag = 'internal scratch']
  %s0 = inlined_call_operand.hbm [shape: f32[3], index: 0, kind: input, shape index: {}]
  %s1 = inlined_call_operand.hbm [shape: f32[2,4,256], index: 1, kind: input, shape index: {}]
  %s2 = inlined_call_operand.hbm [shape: f32[2,4,256], index: 2, kind: output, shape index: {}]
  %s3 = sld [smem:[#allocation0]]
  $region26: #{tpu_custom_call.1} parent=0
    _
  %s5 = ssub.s32 1, %s3
  %s6 = scalar_select 0, %s5, %s3
  $region1: #{tpu_custom_call.1} parent=0
    #allocation2 [shape = 'u8[512]{0}', space=smem, size = 0x200, scoped, tag = 'input window, operand 0, single buffered']
    #allocation3 [shape = 's32[1]{0}', space=sflag, size = 0x4, scoped, tag = 'scoped memory for tpu_custom_call.1']
    #allocation4 [shape = 's32[1]{0}', space=sflag, size = 0x4, scoped, tag = 'scoped memory for tpu_custom_call.1']
    #allocation5 [shape = 's32[1]{0}', space=sflag, size = 0x4, scoped, tag = 'scoped memory for tpu_custom_call.1']
    #allocation6 [shape = 'u8[8192]{0}', space=vmem, size = 0x2000, scoped, tag = 'input window, operand 1, single buffered']
    #allocation7 [shape = 'u8[8192]{0}', space=vmem, size = 0x2000, scoped, tag = 'output window, operand 0, single buffered']
    %7 = vsyncpa [#allocation5], 0
    %8 = vsyncpa [#allocation3], 0
    %9 = vsyncpa [#allocation4], 0
    // Predicated region
    $region2: #{tpu_custom_call.1} parent=1 // pred_check
      _
    $region3: #{tpu_custom_call.1} parent=1 // pred_check_branch
      %11 = sbr.rel (0) target = $region5
    $region4: #{tpu_custom_call.1} parent=1 // pred_region
      %13 = vsyncadd [#allocation5], 0
      %s15 = sshll.u32 %s0, 4
      %s16 = int_to_ptr.hbm [resolvable:$true] %s15
      %18 = dma.hbm_to_smem %s16, 16, [#allocation2], [#allocation5]
    $region5: #{tpu_custom_call.1} parent=1 // pred_fallthru
      _
    // Predicated region
    $region6: #{tpu_custom_call.1} parent=1 // pred_check
      _
    $region7: #{tpu_custom_call.1} parent=1 // pred_check_branch
      %20 = sbr.rel (0) target = $region9
    $region8: #{tpu_custom_call.1} parent=1 // pred_region
      %22 = vsyncadd [#allocation3], 0
      %s23 = sshll.u32 %s1, 4
      %s24 = int_to_ptr.hbm [resolvable:$true] %s23
      %s25 = sshll.u32 [#allocation6], 4
      %s26 = int_to_ptr.vmem [resolvable:$true] %s25
      %31 = dma.hbm_to_vmem [thread:$0]  %s24, 256, %s26, [#allocation3], 128, 128, 8
    $region9: #{tpu_custom_call.1} parent=1 // pred_fallthru
      _
    // Predicated region
    $region10: #{tpu_custom_call.1} parent=1 // pred_check
      _
    $region11: #{tpu_custom_call.1} parent=1 // pred_check_branch
      %33 = sbr.rel (0) target = $region13
    $region12: #{tpu_custom_call.1} parent=1 // pred_region
      %35 = dma.done [#allocation5], 16
    $region13: #{tpu_custom_call.1} parent=1 // pred_fallthru
      _
    // Predicated region
    $region14: #{tpu_custom_call.1} parent=1 // pred_check
      _
    $region15: #{tpu_custom_call.1} parent=1 // pred_check_branch
      %37 = sbr.rel (0) target = $region17
    $region16: #{tpu_custom_call.1} parent=1 // pred_region
      %39 = dma.done [#allocation3], 256
    $region17: #{tpu_custom_call.1} parent=1 // pred_fallthru
      _
    %40 = sfence
    %v41 = vld [vmem:[#allocation6] sm:$0xff]
    %v42 = vld [vmem:[#allocation6 + $0x8] sm:$0xff]
    %45 = vst [vmem:[#allocation1] ss:$2 sm:$0xff] %v41
    %v46 = vld.sshfl [vmem:[#allocation1] sm:$0xff pattern:$0x75316420]
    %v47 = vld.sshfl [vmem:[#allocation1 + $0x8] sm:$0xff pattern:$0x75316420]
    %s48 = scalar_lea.vmem [#allocation1], 16
    %49 = vst [vmem:[%s48] ss:$2 sm:$0xff] %v42
    %v50 = vld.sshfl [vmem:[#allocation1 + $0x10] sm:$0xff pattern:$0x75316420]
    %v51 = vld.sshfl [vmem:[#allocation1 + $0x18] sm:$0xff pattern:$0x75316420]
    %vm56 = vcmask 1043456
    %v57 = vsel %vm56, %v46, -inf
    %v58 = vrot.slane %v57, 4
    %v59 = vmax.f32 %v57, %v58
    %v60 = vrot.slane %v59, 2
    %v61 = vmax.f32 %v59, %v60
    %v62 = vrot.slane %v61, 1
    %v63 = vmax.f32 %v61, %v62
    %v64 = vsel %vm56, %v47, -inf
    %v65 = vrot.slane %v64, 4
    %v66 = vmax.f32 %v64, %v65
    %v67 = vrot.slane %v66, 2
    %v68 = vmax.f32 %v66, %v67
    %v69 = vrot.slane %v68, 1
    %v70 = vmax.f32 %v68, %v69
    %v71 = vsel %vm56, %v50, -inf
    %v72 = vrot.slane %v71, 4
    %v73 = vmax.f32 %v71, %v72
    %v74 = vrot.slane %v73, 2
    %v75 = vmax.f32 %v73, %v74
    %v76 = vrot.slane %v75, 1
    %v77 = vmax.f32 %v75, %v76
    %v78 = vsel %vm56, %v51, -inf
    %v79 = vrot.slane %v78, 4
    %v80 = vmax.f32 %v78, %v79
    %v81 = vrot.slane %v80, 2
    %v82 = vmax.f32 %v80, %v81
    %v83 = vrot.slane %v82, 1
    %v84 = vmax.f32 %v82, %v83
    %85 = vst [vmem:[#allocation1] ss:$2 sm:$0xff] %v41
    %v86 = vld.sshfl [vmem:[#allocation1] sm:$0xff pattern:$0x75316420]
    %v87 = vld.sshfl [vmem:[#allocation1 + $0x8] sm:$0xff pattern:$0x75316420]
    %s88 = scalar_lea.vmem [#allocation1], 16
    %89 = vst [vmem:[%s88] ss:$2 sm:$0xff] %v42
    %v90 = vld.sshfl [vmem:[#allocation1 + $0x10] sm:$0xff pattern:$0x75316420]
    %v91 = vld.sshfl [vmem:[#allocation1 + $0x18] sm:$0xff pattern:$0x75316420]
    %v96 = vsel %vm56, %v86, 0.0
    %v97 = vrot.slane %v96, 4
    %v98 = vadd.f32 %v96, %v97
    %v99 = vrot.slane %v98, 2
    %v100 = vadd.f32 %v98, %v99
    %v101 = vrot.slane %v100, 1
    %v102 = vadd.f32 %v100, %v101
    %v103 = vsel %vm56, %v87, 0.0
    %v104 = vrot.slane %v103, 4
    %v105 = vadd.f32 %v103, %v104
    %v106 = vrot.slane %v105, 2
    %v107 = vadd.f32 %v105, %v106
    %v108 = vrot.slane %v107, 1
    %v109 = vadd.f32 %v107, %v108
    %v110 = vsel %vm56, %v90, 0.0
    %v111 = vrot.slane %v110, 4
    %v112 = vadd.f32 %v110, %v111
    %v113 = vrot.slane %v112, 2
    %v114 = vadd.f32 %v112, %v113
    %v115 = vrot.slane %v114, 1
    %v116 = vadd.f32 %v114, %v115
    %v117 = vsel %vm56, %v91, 0.0
    %v118 = vrot.slane %v117, 4
    %v119 = vadd.f32 %v117, %v118
    %v120 = vrot.slane %v119, 2
    %v121 = vadd.f32 %v119, %v120
    %v122 = vrot.slane %v121, 1
    %v123 = vadd.f32 %v121, %v122
    %s124 = sld [smem:[#allocation2]]
    %v125 = vstv %s124
    %v126 = vmul.f32 %v125, %v63
    %v127 = vmul.f32 %v125, %v70
    %v128 = vmul.f32 %v125, %v77
    %v129 = vmul.f32 %v125, %v84
    %s130 = sld [smem:[#allocation2 + $0x1]]
    %v131 = vstv %s130
    %v132 = vmul.f32 %v131, %v102
    %v133 = vmul.f32 %v131, %v109
    %v134 = vmul.f32 %v131, %v116
    %v135 = vmul.f32 %v131, %v123
    %v136 = vadd.f32 %v126, %v132
    %v137 = vadd.f32 %v127, %v133
    %v138 = vadd.f32 %v128, %v134
    %v139 = vadd.f32 %v129, %v135
    %s140 = sld [smem:[#allocation2 + $0x2]]
    %v141 = vstv %s140
    %v142 = vadd.f32 %v136, %v141
    %v143 = vadd.f32 %v137, %v141
    %v144 = vadd.f32 %v138, %v141
    %v145 = vadd.f32 %v139, %v141
    %v146 = vxor.u32 %v142, 2147483648
    %v147 = vxor.u32 %v143, 2147483648
    %v148 = vxor.u32 %v144, 2147483648
    %v149 = vxor.u32 %v145, 2147483648
    %v150 = vmul.f32 %v146, 1.442695
    %v151 = vpow.pop %v150
    %v152 = vmul.f32 %v147, 1.442695
    %v153 = vpow.pop %v152
    %v154 = vmul.f32 %v148, 1.442695
    %v155 = vpow.pop %v154
    %v156 = vmul.f32 %v149, 1.442695
    %v157 = vpow.pop %v156
    %v158 = vadd.f32 %v151, 1.0
    %v159 = vadd.f32 %v153, 1.0
    %v160 = vadd.f32 %v155, 1.0
    %v161 = vadd.f32 %v157, 1.0
    %v162 = vrcp.pop %v158
    %v163 = vmul.f32 %v158, %v162
    %v164 = vsub.f32 1.0, %v163
    %v165 = vmul.f32 %v162, %v164
    %v166 = vadd.f32 %v162, %v165
    %vm167 = vweird.f32 %v158
    %vm168 = vweird.f32 %v162
    %vm169 = vmor %vm167, %vm168
    %v170 = vsel %vm169, %v162, %v166
    %v171 = vand.u32 2147483647, %v158
    %vm172 = vcmp.eq.f32.partialorder %v171, 8.507059e+37
    %v173 = vand.u32 %v158, 2147483648
    %v174 = vor.u32 1.1754944e-38, %v173
    %v175 = vsel %vm172, %v174, %v170
    %v176 = vmul.f32 1.0, %v175
    %v177 = vrcp.pop %v159
    %v178 = vmul.f32 %v159, %v177
    %v179 = vsub.f32 1.0, %v178
    %v180 = vmul.f32 %v177, %v179
    %v181 = vadd.f32 %v177, %v180
    %vm182 = vweird.f32 %v159
    %vm183 = vweird.f32 %v177
    %vm184 = vmor %vm182, %vm183
    %v185 = vsel %vm184, %v177, %v181
    %v186 = vand.u32 2147483647, %v159
    %vm187 = vcmp.eq.f32.partialorder %v186, 8.507059e+37
    %v188 = vand.u32 %v159, 2147483648
    %v189 = vor.u32 1.1754944e-38, %v188
    %v190 = vsel %vm187, %v189, %v185
    %v191 = vmul.f32 1.0, %v190
    %v192 = vrcp.pop %v160
    %v193 = vmul.f32 %v160, %v192
    %v194 = vsub.f32 1.0, %v193
    %v195 = vmul.f32 %v192, %v194
    %v196 = vadd.f32 %v192, %v195
    %vm197 = vweird.f32 %v160
    %vm198 = vweird.f32 %v192
    %vm199 = vmor %vm197, %vm198
    %v200 = vsel %vm199, %v192, %v196
    %v201 = vand.u32 2147483647, %v160
    %vm202 = vcmp.eq.f32.partialorder %v201, 8.507059e+37
    %v203 = vand.u32 %v160, 2147483648
    %v204 = vor.u32 1.1754944e-38, %v203
    %v205 = vsel %vm202, %v204, %v200
    %v206 = vmul.f32 1.0, %v205
    %v207 = vrcp.pop %v161
    %v208 = vmul.f32 %v161, %v207
    %v209 = vsub.f32 1.0, %v208
    %v210 = vmul.f32 %v207, %v209
    %v211 = vadd.f32 %v207, %v210
    %vm212 = vweird.f32 %v161
    %vm213 = vweird.f32 %v207
    %vm214 = vmor %vm212, %vm213
    %v215 = vsel %vm214, %v207, %v211
    %v216 = vand.u32 2147483647, %v161
    %vm217 = vcmp.eq.f32.partialorder %v216, 8.507059e+37
    %v218 = vand.u32 %v161, 2147483648
    %v219 = vor.u32 1.1754944e-38, %v218
    %v220 = vsel %vm217, %v219, %v215
    %v221 = vmul.f32 1.0, %v220
    %222 = vst [vmem:[#allocation1] ss:$2 sm:$0xff] %v41
    %v223 = vld.sshfl [vmem:[#allocation1] sm:$0xff pattern:$0x75316420]
    %v224 = vld.sshfl [vmem:[#allocation1 + $0x8] sm:$0xff pattern:$0x75316420]
    %s225 = scalar_lea.vmem [#allocation1], 16
    %226 = vst [vmem:[%s225] ss:$2 sm:$0xff] %v42
    %v227 = vld.sshfl [vmem:[#allocation1 + $0x10] sm:$0xff pattern:$0x75316420]
    %v228 = vld.sshfl [vmem:[#allocation1 + $0x18] sm:$0xff pattern:$0x75316420]
    %v233 = vmul.f32 %v176, %v223
    %v234 = vmul.f32 %v191, %v224
    %v235 = vmul.f32 %v206, %v227
    %v236 = vmul.f32 %v221, %v228
    %v241 = vrot.slane %v234, 4
    %v242 = vrot.slane %v236, 4
    %v243 = vsel %vm56, %v233, %v241
    %v244 = vsel %vm56, %v235, %v242
    %247 = vst [vmem:[#allocation7] sm:$0xff] %v243
    %248 = vst [vmem:[#allocation7 + $0x8] sm:$0xff] %v244
    // Predicated region
    $region18: #{tpu_custom_call.1} parent=1 // pred_check
      _
    $region19: #{tpu_custom_call.1} parent=1 // pred_check_branch
      %250 = sbr.rel (0) target = $region21
    $region20: #{tpu_custom_call.1} parent=1 // pred_region
      %252 = vsyncadd [#allocation4], 0
      %s253 = sshll.u32 [#allocation7], 4
      %s254 = int_to_ptr.vmem [resolvable:$true] %s253
      %s255 = sshll.u32 %s2, 4
      %s256 = int_to_ptr.hbm [resolvable:$true] %s255
      %261 = dma.vmem_to_hbm [thread:$0]  %s254, 256, %s256, [#allocation4], 128, 128, 8
    $region21: #{tpu_custom_call.1} parent=1 // pred_fallthru
      _
    // Predicated region
    $region22: #{tpu_custom_call.1} parent=1 // pred_check
      _
    $region23: #{tpu_custom_call.1} parent=1 // pred_check_branch
      %263 = sbr.rel (0) target = $region25
    $region24: #{tpu_custom_call.1} parent=1 // pred_region
      %265 = dma.done [#allocation4], 256
    $region25: #{tpu_custom_call.1} parent=1 // pred_fallthru
      _
    %266 = vsyncpa [#allocation3], 1
    %267 = vsyncpa [#allocation4], 1
    %268 = vsyncpa [#allocation5], 1

</llo_original>
